<compile_context>
chip_gen: v7x
topology: tpu7x:2x2x1
jax: 0.10.0
libtpu: 0.0.40
codegen_flags: <defaults>
</compile_context>

<pallas_src>
import functools

import jax
import jax.numpy as jnp
from jax import lax
from jax.experimental import pallas as pl
from jax.experimental.pallas import tpu as pltpu

KSIZE = 7
PAD = KSIZE // 2
HALO = 8  # 8-row halo blocks == one sublane tile of image rows


def _vmem_limit_bytes():
    """Generation-aware scoped-VMEM cap: ~3/4 of physical, capped at 100 MiB."""
    cap = 64 * 1024 * 1024
    try:
        cap = int(getattr(pltpu.get_tpu_info(), "vmem_capacity_bytes", cap)) or cap
    except Exception:
        pass
    return min(cap * 3 // 4, 100 * 1024 * 1024)


def _pick_tile(total, target, mults=(128, 8, 1)):
    """Largest divisor of `total` <= target, preferring the given multiples."""
    target = max(1, min(target, total))
    for mult in mults:
        t = target - target % mult
        while t > 0:
            if total % t == 0:
                return t
            t -= mult
    return total


# ----------------------------------------------------------------------------
# Kernel 1: RMSNorm + fc1 (MXU), emitting (g,i) columns and conv columns
# ----------------------------------------------------------------------------
def _norm_fc1_kernel(x_ref, gamma_ref, w_ref, b_ref, gi_ref, c_ref, *, eps, split):
    x = x_ref[...].astype(jnp.float32)
    inv = lax.rsqrt(jnp.mean(x * x, axis=-1, keepdims=True) + eps)
    # Norm math in f32, MXU operands in the weight dtype (fast bf16 pass when
    # the weights are bf16; no per-step f32 upcast of the weight tile).
    y = (x * inv * gamma_ref[...].astype(jnp.float32)).astype(w_ref.dtype)
    acc = jnp.dot(y, w_ref[...], preferred_element_type=jnp.float32)
    acc = acc + b_ref[...].astype(jnp.float32)
    gi_ref[...] = acc[:, :split].astype(gi_ref.dtype)
    c_ref[...] = acc[:, split:].astype(c_ref.dtype)


# ----------------------------------------------------------------------------
# Kernel 2: depthwise 7x7 conv, padding 3 (VPU/XLU)
# ----------------------------------------------------------------------------
def _dwconv_kernel(prev_ref, cur_ref, nxt_ref, w_ref, b_ref, o_ref, xh_ref,
                   *, th, ch, width, wp, cc):
    r = pl.program_id(1)
    is_first = r == 0
    is_last = r == pl.num_programs(1) - 1

    # Line buffer: (th + 6) rows, wp >= width + 6 columns (rounded to a
    # multiple of 8).  Columns [width, wp) stay zero so every kw tap is a pure
    # sublane roll (wrapped lanes land in the zero columns).  Scratch is
    # uninitialised -> re-zero the small pad strip each step (unmasked store).
    xh_ref[:, width:, :] = jnp.zeros((th + 2 * PAD, wp - width, cc),
                                     dtype=xh_ref.dtype)

    top = prev_ref[0, HALO - PAD:HALO, :, :]   # last 3 rows of previous tile
    bot = nxt_ref[0, 0:PAD, :, :]              # first 3 rows of next tile
    xh_ref[0:PAD, 0:width, :] = jnp.where(is_first, jnp.zeros_like(top), top)
    xh_ref[PAD:PAD + th, 0:width, :] = cur_ref[0]
    xh_ref[PAD + th:, 0:width, :] = jnp.where(is_last, jnp.zeros_like(bot), bot)

    taps = w_ref[...].astype(jnp.float32)      # (49, cc), read once per step
    bias = b_ref[0, :].astype(jnp.float32)     # (cc,)
    n_chunks = th // ch

    def chunk(s, carry):
        base = pl.multiple_of(s * ch, ch)
        # vreg-sized accumulator: only the first `width` columns are kept.
        acc = jnp.zeros((ch, width, cc), jnp.float32) + bias
        for kh in range(KSIZE):
            rows = xh_ref[pl.ds(base + kh, ch), :, :].astype(jnp.float32)
            for kw in range(KSIZE):
                sh = rows if kw == PAD else pltpu.roll(
                    rows, shift=(PAD - kw) % wp, axis=1)
                acc = acc + sh[:, :width, :] * taps[kh * KSIZE + kw]
        o_ref[0, pl.ds(base, ch), :, :] = acc.astype(o_ref.dtype)
        return carry

    lax.fori_loop(0, n_chunks, chunk, 0)


def dwconv7x7(x_img, weight49, bias, *, vmem_limit=None):
    """Depthwise 7x7 conv (padding 3) over an NHWC image (Pallas TPU)."""
    B, H, W, Cc = x_img.shape
    if vmem_limit is None:
        vmem_limit = _vmem_limit_bytes()

    th = _pick_tile(H, 32, mults=(8, 1))      # row tile, multiple of 8 if possible
    if th % HALO:
        th = H                                 # fallback: single tile, halos masked
    R = H // th
    ch = HALO if th % HALO == 0 else th        # accumulator chunk rows
    cpt = max(th // HALO, 1)                   # 8-row blocks per row tile
    h8 = -(-H // HALO)                         # 8-row blocks in the image
    wp = -(-(W + 2 * PAD) // 8) * 8            # sublane-aligned line-buffer width

    kernel = functools.partial(_dwconv_kernel, th=th, ch=ch, width=W, wp=wp, cc=Cc)

    cur_map = lambda b, r: (b, r, 0, 0)
    # 8-row halo views of the same input: only ~1.5x conv-input DMA at th=32.
    prev_map = lambda b, r: (b, jnp.maximum(r * cpt - 1, 0), 0, 0)
    next_map = lambda b, r: (b, jnp.minimum((r + 1) * cpt, h8 - 1), 0, 0)

    return pl.pallas_call(
        kernel,
        out_shape=jax.ShapeDtypeStruct((B, H, W, Cc), x_img.dtype),
        grid_spec=pltpu.PrefetchScalarGridSpec(
            num_scalar_prefetch=0,
            grid=(B, R),
            in_specs=[
                pl.BlockSpec((1, HALO, W, Cc), prev_map),
                pl.BlockSpec((1, th, W, Cc), cur_map),
                pl.BlockSpec((1, HALO, W, Cc), next_map),
                pl.BlockSpec((KSIZE * KSIZE, Cc), lambda b, r: (0, 0)),
                pl.BlockSpec((1, Cc), lambda b, r: (0, 0)),
            ],
            out_specs=pl.BlockSpec((1, th, W, Cc), cur_map),
            scratch_shapes=[pltpu.VMEM((th + 2 * PAD, wp, Cc), x_img.dtype)],
        ),
        compiler_params=pltpu.CompilerParams(
            dimension_semantics=("parallel", "parallel"),
            vmem_limit_bytes=vmem_limit),
    )(x_img, x_img, x_img, weight49, bias.reshape(1, Cc))


# ----------------------------------------------------------------------------
# Kernel 3: Mish(g) * cat(i, conv(c)) then fc2 (single K=hidden MXU dot)
# ----------------------------------------------------------------------------
def _gate_fc2_kernel(gi_ref, c_ref, w2_ref, b_ref, o_ref, *, hidden):
    gi = gi_ref[...].astype(jnp.float32)
    g = gi[:, :hidden]
    # Mish(g) = g * tanh(softplus(g)) = g * e(e+2) / (e(e+2)+2) with e = exp(g):
    # one EUP transcendental + one approx reciprocal instead of exp+log+tanh.
    e = jnp.exp(jnp.minimum(g, 20.0))
    t = e * (e + 2.0)
    a = jnp.where(g > 20.0, g, g * t * pl.reciprocal(t + 2.0, approx=True))
    ic = jnp.concatenate([gi[:, hidden:], c_ref[...].astype(jnp.float32)], axis=-1)
    u = (a * ic).astype(w2_ref.dtype)
    acc = jnp.dot(u, w2_ref[...], preferred_element_type=jnp.float32)
    o_ref[...] = (acc + b_ref[...].astype(jnp.float32)).astype(o_ref.dtype)


# ----------------------------------------------------------------------------
# Full GatedCNNBlock forward (att=False -> DConv)
# ----------------------------------------------------------------------------
def gated_cnn_block_forward(x, res, params, *, eps=1e-6):
    """x: (B, N, C), res = (H, W) with N = H*W.

    params:
      norm_w (C,), w1 (C, 2*hidden), b1 (2*hidden,),
      conv_w (49, conv_channels)  [torch (Cc,1,7,7) laid out as (kh*7+kw, Cc)],
      conv_b (conv_channels,), w2 (hidden, C), b2 (C,)
      (w1/w2 already transposed w.r.t. torch nn.Linear.weight).
    """
    H, W = res
    B, N, C = x.shape
    assert N == H * W
    hidden2 = params["w1"].shape[1]
    hidden = hidden2 // 2
    cc = params["conv_w"].shape[-1]
    dim_out = params["w2"].shape[1]
    split = hidden2 - cc                       # g (+) i columns; conv columns last
    assert hidden > cc, "split needs a non-empty identity part (hidden > conv_channels)"

    M = B * N
    x2 = x.reshape(M, C)
    itemsize = jnp.dtype(x.dtype).itemsize
    vmem_limit = _vmem_limit_bytes()

    # HBM-bound matmul kernels: large token tiles (512-1024 target), bounded by
    # the per-generation VMEM budget, kept to >=2 grid steps (v7x: 2 TCs).
    tm_target = 512 if vmem_limit <= 48 * 1024 * 1024 else 1024
    per_row = 2 * (C + 2 * hidden2 + dim_out) * max(itemsize, 4)
    weight_bytes = 2 * (C * hidden2 + hidden * dim_out) * itemsize
    budget = int(vmem_limit * 0.6) - weight_bytes
    if budget > per_row:
        tm_target = min(tm_target, budget // per_row)
    if M >= 256:
        tm_target = min(tm_target, M // 2)
    tm = _pick_tile(M, int(tm_target))

    cparams = pltpu.CompilerParams(dimension_semantics=("parallel",),
                                   vmem_limit_bytes=vmem_limit)

    # --- 1. RMSNorm + fc1: emit (g,i) slab and conv slab separately ---
    gi, c_cols = pl.pallas_call(
        functools.partial(_norm_fc1_kernel, eps=eps, split=split),
        out_shape=(jax.ShapeDtypeStruct((M, split), x.dtype),
                   jax.ShapeDtypeStruct((M, cc), x.dtype)),
        grid_spec=pltpu.PrefetchScalarGridSpec(
            num_scalar_prefetch=0,
            grid=(M // tm,),
            in_specs=[
                pl.BlockSpec((tm, C), lambda m: (m, 0)),
                pl.BlockSpec((1, C), lambda m: (0, 0)),
                pl.BlockSpec((C, hidden2), lambda m: (0, 0)),
                pl.BlockSpec((1, hidden2), lambda m: (0, 0)),
            ],
            out_specs=[pl.BlockSpec((tm, split), lambda m: (m, 0)),
                       pl.BlockSpec((tm, cc), lambda m: (m, 0))],
        ),
        compiler_params=cparams,
    )(x2, params["norm_w"].reshape(1, C), params["w1"],
      params["b1"].reshape(1, hidden2))

    # --- 2. depthwise 7x7 conv on the conv slab (contiguous reshape, no slice) ---
    c_conv = dwconv7x7(c_cols.reshape(B, H, W, cc), params["conv_w"],
                       params["conv_b"], vmem_limit=vmem_limit).reshape(M, cc)

    # --- 3. Mish gate + single K=hidden fc2 ---
    out = pl.pallas_call(
        functools.partial(_gate_fc2_kernel, hidden=hidden),
        out_shape=jax.ShapeDtypeStruct((M, dim_out), x.dtype),
        grid_spec=pltpu.PrefetchScalarGridSpec(
            num_scalar_prefetch=0,
            grid=(M // tm,),
            in_specs=[
                pl.BlockSpec((tm, split), lambda m: (m, 0)),
                pl.BlockSpec((tm, cc), lambda m: (m, 0)),
                pl.BlockSpec((hidden, dim_out), lambda m: (0, 0)),
                pl.BlockSpec((1, dim_out), lambda m: (0, 0)),
            ],
            out_specs=pl.BlockSpec((tm, dim_out), lambda m: (m, 0)),
        ),
        compiler_params=cparams,
    )(gi, c_conv, params["w2"], params["b2"].reshape(1, dim_out))

    return out.reshape(B, N, dim_out)


# ----------------------------------------------------------------------------
# Pure-JAX reference (same math as the PyTorch module)
# ----------------------------------------------------------------------------
def _reference_block(x, res, params, *, eps=1e-6):
    H, W = res
    B, N, C = x.shape
    hidden2 = params["w1"].shape[1]
    hidden = hidden2 // 2
    cc = params["conv_w"].shape[-1]
    xf = x.astype(jnp.float32)
    y = xf * lax.rsqrt(jnp.mean(xf * xf, axis=-1, keepdims=True) + eps)
    y = y * params["norm_w"]
    y = jnp.dot(y, params["w1"], precision=lax.Precision.HIGHEST) + params["b1"]
    g = y[..., :hidden]
    i = y[..., hidden:hidden2 - cc]
    c = y[..., hidden2 - cc:]
    filt = params["conv_w"].reshape(KSIZE, KSIZE, 1, cc)
    c_img = lax.conv_general_dilated(
        c.reshape(B, H, W, cc), filt, (1, 1), ((PAD, PAD), (PAD, PAD)),
        dimension_numbers=("NHWC", "HWIO", "NHWC"),
        feature_group_count=cc, precision=lax.Precision.HIGHEST)
    c = (c_img + params["conv_b"]).reshape(B, N, cc)
    a = g * jnp.tanh(jnp.maximum(g, 0.0) + jnp.log(1.0 + jnp.exp(-jnp.abs(g))))
    u = a * jnp.concatenate([i, c], axis=-1)
    return jnp.dot(u, params["w2"], precision=lax.Precision.HIGHEST) + params["b2"]


if __name__ == "__main__":
    B, H, W = 2, 16, 16
    dim = 48                                   # GatedCNNBlock dim
    hidden = int((8 / 3) * dim)                # 128
    cc = dim                                   # conv_ratio = 1.0
    N = H * W

    keys = jax.random.split(jax.random.PRNGKey(0), 9)
    x = jax.random.normal(keys[0], (B, N, dim), dtype=jnp.float32)
    params = dict(
        norm_w=1.0 + 0.1 * jax.random.normal(keys[1], (dim,), dtype=jnp.float32),
        w1=0.05 * jax.random.normal(keys[2], (dim, 2 * hidden), dtype=jnp.float32),
        b1=0.02 * jax.random.normal(keys[3], (2 * hidden,), dtype=jnp.float32),
        conv_w=0.1 * jax.random.normal(keys[4], (KSIZE * KSIZE, cc), dtype=jnp.float32),
        conv_b=0.1 * jax.random.normal(keys[5], (cc,), dtype=jnp.float32),
        w2=0.05 * jax.random.normal(keys[6], (hidden, dim), dtype=jnp.float32),
        b2=0.02 * jax.random.normal(keys[7], (dim,), dtype=jnp.float32),
    )

    out = gated_cnn_block_forward(x, (H, W), params)
    jax.block_until_ready(out)
    assert out.shape == (B, N, dim)

    # Unit check: the depthwise-conv kernel against XLA's grouped conv.
    c_probe = jax.random.normal(keys[8], (B, H, W, cc), dtype=jnp.float32)
    conv_out = dwconv7x7(c_probe, params["conv_w"], params["conv_b"])
    conv_ref = lax.conv_general_dilated(
        c_probe, params["conv_w"].reshape(KSIZE, KSIZE, 1, cc),
        (1, 1), ((PAD, PAD), (PAD, PAD)),
        dimension_numbers=("NHWC", "HWIO", "NHWC"),
        feature_group_count=cc, precision=lax.Precision.HIGHEST,
    ) + params["conv_b"]
    assert jnp.allclose(conv_out, conv_ref, atol=1e-4, rtol=1e-4), (
        float(jnp.max(jnp.abs(conv_out - conv_ref))))

    # End-to-end check of the whole GatedCNNBlock forward.
    ref = _reference_block(x, (H, W), params)
    assert jnp.allclose(out, ref, atol=2e-2, rtol=2e-2), (
        float(jnp.max(jnp.abs(out - ref))))

    print("KERNEL_OK")
</pallas_src>

<mosaic_0001>
module attributes {stable_mosaic.version = 11 : i64} {
  func.func @_norm_fc1_kernel(%arg0: i32, %arg1: memref<256x48xf32, #tpu.memory_space<vmem>>, %arg2: memref<1x48xf32, #tpu.memory_space<vmem>>, %arg3: memref<48x256xf32, #tpu.memory_space<vmem>>, %arg4: memref<1x256xf32, #tpu.memory_space<vmem>>, %arg5: memref<256x208xf32, #tpu.memory_space<vmem>>, %arg6: memref<256x48xf32, #tpu.memory_space<vmem>>) attributes {dimension_semantics = [#tpu.dimension_semantics<parallel>], iteration_bounds = array<i64: 2>, scalar_prefetch = 0 : i64, scratch_operands = 0 : i64, tpu.core_type = #tpu.core_type<tc>, window_params = [{transform_indices = @transform_0, window_bounds = array<i64: 256, 48>}, {pipeline_mode = #tpu.pipeline_mode<synchronous>, transform_indices = @transform_1, window_bounds = array<i64: 1, 48>}, {pipeline_mode = #tpu.pipeline_mode<synchronous>, transform_indices = @transform_2, window_bounds = array<i64: 48, 256>}, {pipeline_mode = #tpu.pipeline_mode<synchronous>, transform_indices = @transform_3, window_bounds = array<i64: 1, 256>}, {transform_indices = @transform_4, window_bounds = array<i64: 256, 208>}, {transform_indices = @transform_5, window_bounds = array<i64: 256, 48>}]} {
    %c0 = arith.constant 0 : index
    %c0_0 = arith.constant 0 : index
    %0 = vector.load %arg1[%c0, %c0_0] : memref<256x48xf32, #tpu.memory_space<vmem>>, vector<256x48xf32>
    %1 = arith.mulf %0, %0 : vector<256x48xf32>
    %cst = arith.constant dense<0.000000e+00> : vector<256xf32>
    %2 = vector.multi_reduction <add>, %1, %cst [1] : vector<256x48xf32> to vector<256xf32>
    %3 = vector.shape_cast %2 : vector<256xf32> to vector<256x1xf32>
    %cst_1 = arith.constant 4.800000e+01 : f32
    %4 = vector.broadcast %cst_1 : f32 to vector<256x1xf32>
    %5 = arith.divf %3, %4 : vector<256x1xf32>
    %cst_2 = arith.constant 9.99999997E-7 : f32
    %6 = vector.broadcast %cst_2 : f32 to vector<256x1xf32>
    %7 = arith.addf %5, %6 : vector<256x1xf32>
    %8 = math.rsqrt %7 : vector<256x1xf32>
    %9 = vector.broadcast %8 : vector<256x1xf32> to vector<256x48xf32>
    %10 = arith.mulf %0, %9 : vector<256x48xf32>
    %c0_3 = arith.constant 0 : index
    %c0_4 = arith.constant 0 : index
    %11 = vector.load %arg2[%c0_3, %c0_4] : memref<1x48xf32, #tpu.memory_space<vmem>>, vector<1x48xf32>
    %12 = vector.broadcast %11 : vector<1x48xf32> to vector<256x48xf32>
    %13 = arith.mulf %10, %12 : vector<256x48xf32>
    %c0_5 = arith.constant 0 : index
    %c0_6 = arith.constant 0 : index
    %14 = vector.load %arg3[%c0_5, %c0_6] : memref<48x256xf32, #tpu.memory_space<vmem>>, vector<48x256xf32>
    %cst_7 = arith.constant dense<0.000000e+00> : vector<256x256xf32>
    %15 = tpu.matmul %13, %14, %cst_7 {dimension_numbers = #tpu.dot_dimension_numbers<[1], [0], [0], [1], [0, 0, 1, 1], [], []>} : vector<256x48xf32>, vector<48x256xf32>, vector<256x256xf32> -> vector<256x256xf32>
    %c0_8 = arith.constant 0 : index
    %c0_9 = arith.constant 0 : index
    %16 = vector.load %arg4[%c0_8, %c0_9] : memref<1x256xf32, #tpu.memory_space<vmem>>, vector<1x256xf32>
    %17 = vector.broadcast %16 : vector<1x256xf32> to vector<256x256xf32>
    %18 = arith.addf %15, %17 : vector<256x256xf32>
    %19 = vector.extract_strided_slice %18 {offsets = [0, 0], sizes = [256, 208], strides = [1, 1]} : vector<256x256xf32> to vector<256x208xf32>
    %c0_10 = arith.constant 0 : index
    %c0_11 = arith.constant 0 : index
    %20 = vector.load %arg5[%c0_10, %c0_11] : memref<256x208xf32, #tpu.memory_space<vmem>>, vector<256x208xf32>
    tpu.vector_store %arg5[%c0_10, %c0_11], %19 {strides = array<i32>} : memref<256x208xf32, #tpu.memory_space<vmem>>, vector<256x208xf32>,
    %21 = vector.extract_strided_slice %18 {offsets = [0, 208], sizes = [256, 48], strides = [1, 1]} : vector<256x256xf32> to vector<256x48xf32>
    %c0_12 = arith.constant 0 : index
    %c0_13 = arith.constant 0 : index
    %22 = vector.load %arg6[%c0_12, %c0_13] : memref<256x48xf32, #tpu.memory_space<vmem>>, vector<256x48xf32>
    tpu.vector_store %arg6[%c0_12, %c0_13], %21 {strides = array<i32>} : memref<256x48xf32, #tpu.memory_space<vmem>>, vector<256x48xf32>,
    return
  }
  func.func @transform_0(%arg0: i32) -> (i32, i32) {
    %c0_i32 = arith.constant 0 : i32
    %c0_i32_0 = arith.constant 0 : i32
    return %arg0, %c0_i32 : i32, i32
  }
  func.func @transform_1(%arg0: i32) -> (i32, i32) {
    %c0_i32 = arith.constant 0 : i32
    %c0_i32_0 = arith.constant 0 : i32
    %c0_i32_1 = arith.constant 0 : i32
    return %c0_i32, %c0_i32_0 : i32, i32
  }
  func.func @transform_2(%arg0: i32) -> (i32, i32) {
    %c0_i32 = arith.constant 0 : i32
    %c0_i32_0 = arith.constant 0 : i32
    %c0_i32_1 = arith.constant 0 : i32
    return %c0_i32, %c0_i32_0 : i32, i32
  }
  func.func @transform_3(%arg0: i32) -> (i32, i32) {
    %c0_i32 = arith.constant 0 : i32
    %c0_i32_0 = arith.constant 0 : i32
    %c0_i32_1 = arith.constant 0 : i32
    return %c0_i32, %c0_i32_0 : i32, i32
  }
  func.func @transform_4(%arg0: i32) -> (i32, i32) {
    %c0_i32 = arith.constant 0 : i32
    %c0_i32_0 = arith.constant 0 : i32
    return %arg0, %c0_i32 : i32, i32
  }
  func.func @transform_5(%arg0: i32) -> (i32, i32) {
    %c0_i32 = arith.constant 0 : i32
    %c0_i32_0 = arith.constant 0 : i32
    return %arg0, %c0_i32 : i32, i32
  }
}

</mosaic_0001>

<llo_original>
// kernel: tpu_custom_call.1
$region0: #{tpu_custom_call.1}
  #allocation0 [shape = 'u32[]', space=smem, size = 0x4, offset = 0x4, fixed_abs, tag = 'smem constant byte address 0x4 - core index']
  #allocation1 [shape = 'u32[144,128]{1,0:T(1,128)}', space=vmem, size = 0x12000, scoped, tag = 'internal scratch']
  %s0 = inlined_call_operand.vmem [shape: f32[512,48], index: 0, kind: input, shape index: {}]
  %s1 = inlined_call_operand.vmem [shape: f32[1,48], index: 1, kind: input, shape index: {}]
  %s2 = inlined_call_operand.vmem [shape: f32[48,256], index: 2, kind: input, shape index: {}]
  %s3 = inlined_call_operand.vmem [shape: f32[1,256], index: 3, kind: input, shape index: {}]
  %s4 = inlined_call_operand.vmem [shape: f32[512,208], index: 4, kind: output, shape index: {0}]
  %s5 = inlined_call_operand.vmem [shape: f32[512,48], index: 5, kind: output, shape index: {1}]
  %6 = xla_tuple %s4, %s5
  %s7 = sld [smem:[#allocation0]]
  $region57: #{tpu_custom_call.1} parent=0
    _
  %s9 = ssub.s32 1, %s7
  %s10 = scalar_select 0, %s9, %s7
  loop: start=0, step=1, limit=4
  $region2: #{tpu_custom_call.1} parent=0 // loop_pre_header
    _
  $region3: #{tpu_custom_call.1} parent=0 // loop_header
    %s12 = sphi 0, %s16
    %p13 = scmp.ge.s32.totalorder %s12, 4
    %s22 = sphi 0, %s24
    %s25 = sphi 0, %s22
    %s26 = sphi 0, %s25
    %s42 = sphi 0, %s26
    %s46 = sphi 0, %s46
    %s48 = sphi 0, %s46
    %s49 = sphi 0, %s48
    %s63 = sphi 0, %s49
    %s67 = sphi 0, %s67
    %s69 = sphi 0, %s67
    %s70 = sphi 0, %s69
    %s84 = sphi 0, %s70
    %s88 = sphi 0, %s88
    %s90 = sphi 0, %s88
    %s91 = sphi 0, %s90
    %s105 = sphi 0, %s91
    %s111 = sphi 0, %s113
    %s114 = sphi 0, %s111
    %s115 = sphi 0, %s114
    %s131 = sphi 0, %s115
    %s137 = sphi 0, %s139
    %s140 = sphi 0, %s137
    %s141 = sphi 0, %s140
    %s157 = sphi 0, %s141
  $region4: #{tpu_custom_call.1} parent=0 // loop_header_branch
    %15 = sbr.rel (%p13) target = $region8
  $region5: #{tpu_custom_call.1} parent=0 // loop_body
    %s17 = ssub.s32 %s12, 1
    %s18 = ssub.s32 %s12, 2
    %s19 = sadd.s32 %s12, 1
    %s20 = ssub.s32 %s12, %s19
    %p21 = scmp.eq.s32.totalorder %s20, 0
    %s23 = sadd.s32 %s22, 1
    %s24 = scalar_select %p21, %s22, %s23
    %p27 = pneg %p21
    %p28 = scmp.eq.s32.totalorder %s12, 1
    %p29 = por %p27, %p28
    %p30 = scmp.ne.s32.totalorder %s22, %s25
    %p31 = scmp.eq.s32.totalorder %s12, 0
    %p32 = por %p30, %p31
    %p33 = scmp.ne.s32.totalorder %s22, %s25
    %p34 = scmp.eq.s32.totalorder %s17, 1
    %p35 = por %p33, %p34
    %p36 = scmp.ne.s32.totalorder %s25, %s26
    %p37 = scmp.eq.s32.totalorder %s17, 0
    %p38 = por %p36, %p37
    %p39 = scmp.ne.s32.totalorder %s25, %s26
    %p40 = scmp.eq.s32.totalorder %s18, 1
    %p41 = por %p39, %p40
    %p43 = scmp.ne.s32.totalorder %s26, %s42
    %p44 = scmp.eq.s32.totalorder %s18, 0
    %p45 = por %p43, %p44
    %s47 = sadd.s32 %s46, 1
    %p50 = scmp.eq.s32.totalorder %s12, 1
    %p51 = scmp.ne.s32.totalorder %s46, %s48
    %p52 = scmp.eq.s32.totalorder %s12, 0
    %p53 = por %p51, %p52
    %p54 = scmp.ne.s32.totalorder %s46, %s48
    %p55 = scmp.eq.s32.totalorder %s17, 1
    %p56 = por %p54, %p55
    %p57 = scmp.ne.s32.totalorder %s48, %s49
    %p58 = scmp.eq.s32.totalorder %s17, 0
    %p59 = por %p57, %p58
    %p60 = scmp.ne.s32.totalorder %s48, %s49
    %p61 = scmp.eq.s32.totalorder %s18, 1
    %p62 = por %p60, %p61
    %p64 = scmp.ne.s32.totalorder %s49, %s63
    %p65 = scmp.eq.s32.totalorder %s18, 0
    %p66 = por %p64, %p65
    %s68 = sadd.s32 %s67, 1
    %p71 = scmp.eq.s32.totalorder %s12, 1
    %p72 = scmp.ne.s32.totalorder %s67, %s69
    %p73 = scmp.eq.s32.totalorder %s12, 0
    %p74 = por %p72, %p73
    %p75 = scmp.ne.s32.totalorder %s67, %s69
    %p76 = scmp.eq.s32.totalorder %s17, 1
    %p77 = por %p75, %p76
    %p78 = scmp.ne.s32.totalorder %s69, %s70
    %p79 = scmp.eq.s32.totalorder %s17, 0
    %p80 = por %p78, %p79
    %p81 = scmp.ne.s32.totalorder %s69, %s70
    %p82 = scmp.eq.s32.totalorder %s18, 1
    %p83 = por %p81, %p82
    %p85 = scmp.ne.s32.totalorder %s70, %s84
    %p86 = scmp.eq.s32.totalorder %s18, 0
    %p87 = por %p85, %p86
    %s89 = sadd.s32 %s88, 1
    %p92 = scmp.eq.s32.totalorder %s12, 1
    %p93 = scmp.ne.s32.totalorder %s88, %s90
    %p94 = scmp.eq.s32.totalorder %s12, 0
    %p95 = por %p93, %p94
    %p96 = scmp.ne.s32.totalorder %s88, %s90
    %p97 = scmp.eq.s32.totalorder %s17, 1
    %p98 = por %p96, %p97
    %p99 = scmp.ne.s32.totalorder %s90, %s91
    %p100 = scmp.eq.s32.totalorder %s17, 0
    %p101 = por %p99, %p100
    %p102 = scmp.ne.s32.totalorder %s90, %s91
    %p103 = scmp.eq.s32.totalorder %s18, 1
    %p104 = por %p102, %p103
    %p106 = scmp.ne.s32.totalorder %s91, %s105
    %p107 = scmp.eq.s32.totalorder %s18, 0
    %p108 = por %p106, %p107
    %s109 = ssub.s32 %s12, %s19
    %p110 = scmp.eq.s32.totalorder %s109, 0
    %s112 = sadd.s32 %s111, 1
    %s113 = scalar_select %p110, %s111, %s112
    %p116 = pneg %p110
    %p117 = scmp.eq.s32.totalorder %s12, 1
    %p118 = por %p116, %p117
    %p119 = scmp.ne.s32.totalorder %s111, %s114
    %p120 = scmp.eq.s32.totalorder %s12, 0
    %p121 = por %p119, %p120
    %p122 = scmp.ne.s32.totalorder %s111, %s114
    %p123 = scmp.eq.s32.totalorder %s17, 1
    %p124 = por %p122, %p123
    %p125 = scmp.ne.s32.totalorder %s114, %s115
    %p126 = scmp.eq.s32.totalorder %s17, 0
    %p127 = por %p125, %p126
    %p128 = scmp.ne.s32.totalorder %s114, %s115
    %p129 = scmp.eq.s32.totalorder %s18, 1
    %p130 = por %p128, %p129
    %p132 = scmp.ne.s32.totalorder %s115, %s131
    %p133 = scmp.eq.s32.totalorder %s18, 0
    %p134 = por %p132, %p133
    %s135 = ssub.s32 %s12, %s19
    %p136 = scmp.eq.s32.totalorder %s135, 0
    %s138 = sadd.s32 %s137, 1
    %s139 = scalar_select %p136, %s137, %s138
    %p142 = pneg %p136
    %p143 = scmp.eq.s32.totalorder %s12, 1
    %p144 = por %p142, %p143
    %p145 = scmp.ne.s32.totalorder %s137, %s140
    %p146 = scmp.eq.s32.totalorder %s12, 0
    %p147 = por %p145, %p146
    %p148 = scmp.ne.s32.totalorder %s137, %s140
    %p149 = scmp.eq.s32.totalorder %s17, 1
    %p150 = por %p148, %p149
    %p151 = scmp.ne.s32.totalorder %s140, %s141
    %p152 = scmp.eq.s32.totalorder %s17, 0
    %p153 = por %p151, %p152
    %p154 = scmp.ne.s32.totalorder %s140, %s141
    %p155 = scmp.eq.s32.totalorder %s18, 1
    %p156 = por %p154, %p155
    %p158 = scmp.ne.s32.totalorder %s141, %s157
    %p159 = scmp.eq.s32.totalorder %s18, 0
    %p160 = por %p158, %p159
    %p161 = scmp.le.s32.totalorder 1, %s12
    %p162 = scmp.lt.s32.totalorder %s12, 3
    %p163 = pnand %p161, %p162
    %p164 = pneg %p163
    // Predicated region
    $region9: #{tpu_custom_call.1} parent=5 // pred_check
      _
    $region10: #{tpu_custom_call.1} parent=5 // pred_check_branch
      %166 = sbr.rel (%p163) target = $region12
    $region11: #{tpu_custom_call.1} parent=5 // pred_region
      %s167 = ssub.s32 %s12, 1
      // Predicated region
      $region13: #{tpu_custom_call.1} parent=11 // pred_check
        %p168 = pneg %p59
      $region14: #{tpu_custom_call.1} parent=11 // pred_check_branch
        %170 = sbr.rel (%p168) target = $region16
      $region15: #{tpu_custom_call.1} parent=11 // pred_region
        _
      $region16: #{tpu_custom_call.1} parent=11 // pred_fallthru
        _
      // Predicated region
      $region17: #{tpu_custom_call.1} parent=11 // pred_check
        %p171 = pneg %p80
      $region18: #{tpu_custom_call.1} parent=11 // pred_check_branch
        %173 = sbr.rel (%p171) target = $region20
      $region19: #{tpu_custom_call.1} parent=11 // pred_region
        _
      $region20: #{tpu_custom_call.1} parent=11 // pred_fallthru
        _
      // Predicated region
      $region21: #{tpu_custom_call.1} parent=11 // pred_check
        %p174 = pneg %p101
      $region22: #{tpu_custom_call.1} parent=11 // pred_check_branch
        %176 = sbr.rel (%p174) target = $region24
      $region23: #{tpu_custom_call.1} parent=11 // pred_region
        _
      $region24: #{tpu_custom_call.1} parent=11 // pred_fallthru
        _
    $region12: #{tpu_custom_call.1} parent=5 // pred_fallthru
      _
    %p177 = scmp.lt.s32.totalorder %s12, 2
    // Predicated region
    $region25: #{tpu_custom_call.1} parent=5 // pred_check
      %p178 = pneg %p177
    $region26: #{tpu_custom_call.1} parent=5 // pred_check_branch
      %180 = sbr.rel (%p178) target = $region28
    $region27: #{tpu_custom_call.1} parent=5 // pred_region
      // Predicated region
      $region29: #{tpu_custom_call.1} parent=27 // pred_check
        %p181 = pneg %p32
      $region30: #{tpu_custom_call.1} parent=27 // pred_check_branch
        %183 = sbr.rel (%p181) target = $region32
      $region31: #{tpu_custom_call.1} parent=27 // pred_region
        %s184 = smul.u32 32, %s12
        %p185 = scmp.lt.s32.totalorder %s184, 63
        %s186 = scalar_select %p185, %s184, 63
        %s187 = smul.addr %s186, 8
        %s188 = scalar_lea.vmem %s0, %s187
        %s189 = smul.u32 32, %s12
      $region32: #{tpu_custom_call.1} parent=27 // pred_fallthru
        _
    $region28: #{tpu_custom_call.1} parent=5 // pred_fallthru
      _
    %p190 = scmp.le.s32.totalorder 1, %s12
    %p191 = scmp.lt.s32.totalorder %s12, 3
    %p192 = pnand %p190, %p191
    %p193 = pneg %p192
    // Predicated region
    $region33: #{tpu_custom_call.1} parent=5 // pred_check
      _
    $region34: #{tpu_custom_call.1} parent=5 // pred_check_branch
      %195 = sbr.rel (%p192) target = $region36
    $region35: #{tpu_custom_call.1} parent=5 // pred_region
      %s196 = ssub.s32 %s12, 1
      %s197 = smul.u32 32, %s17
      %p198 = scmp.lt.s32.totalorder %s197, 63
      %s199 = scalar_select %p198, %s197, 63
      %s200 = smul.addr %s199, 8
      %s201 = scalar_lea.vmem %s0, %s200
      %p202 = pneg %p38
      %p203 = pneg %p35
      %p204 = pneg %p59
      %p205 = pneg %p56
      %p206 = pneg %p80
      %p207 = pneg %p77
      %p208 = pneg %p101
      %p209 = pneg %p98
      %p210 = pneg %p127
      %p211 = pneg %p124
      %s212 = smul.u32 32, %s17
      %p213 = scmp.lt.s32.totalorder %s212, 63
      %s214 = scalar_select %p213, %s212, 63
      %s215 = smul.addr %s214, 2
      %s216 = smul.addr %s215, 8
      %s217 = scalar_lea.vmem %s4, %s216
      %p218 = pneg %p153
      %p219 = pneg %p150
      %s220 = smul.u32 32, %s17
      %p221 = scmp.lt.s32.totalorder %s220, 63
      %s222 = scalar_select %p221, %s220, 63
      %s223 = smul.addr %s222, 8
      %s224 = scalar_lea.vmem %s5, %s223
      %s225 = smul.u32 32, %s17
      %p226 = scmp.lt.s32.totalorder %s225, 63
      %s227 = scalar_select %p226, %s225, 63
      %s228 = smul.addr %s227, 8
      %s229 = scalar_lea.vmem %s0, %s228
      %s230 = smul.u32 32, %s17
      %s231 = smul.u32 32, %s17
      %p232 = scmp.lt.s32.totalorder %s231, 63
      %s233 = scalar_select %p232, %s231, 63
      %s234 = smul.addr %s233, 2
      %s235 = smul.addr %s234, 8
      %s236 = scalar_lea.vmem %s4, %s235
      %s237 = smul.u32 32, %s17
      %s238 = smul.u32 32, %s17
      %p239 = scmp.lt.s32.totalorder %s238, 63
      %s240 = scalar_select %p239, %s238, 63
      %s241 = smul.addr %s240, 8
      %s242 = scalar_lea.vmem %s5, %s241
      %s243 = smul.u32 32, %s17
      %v244 = vld [vmem:[%s229] sm:$0xff]
      %v245 = vld [vmem:[%s229 + $0x8] sm:$0xff]
      %v246 = vld [vmem:[%s229 + $0x10] sm:$0xff]
      %v247 = vld [vmem:[%s229 + $0x18] sm:$0xff]
      %v248 = vld [vmem:[%s229 + $0x20] sm:$0xff]
      %v249 = vld [vmem:[%s229 + $0x28] sm:$0xff]
      %v250 = vld [vmem:[%s229 + $0x30] sm:$0xff]
      %v251 = vld [vmem:[%s229 + $0x38] sm:$0xff]
      %v252 = vld [vmem:[%s229 + $0x40] sm:$0xff]
      %v253 = vld [vmem:[%s229 + $0x48] sm:$0xff]
      %v254 = vld [vmem:[%s229 + $0x50] sm:$0xff]
      %v255 = vld [vmem:[%s229 + $0x58] sm:$0xff]
      %v256 = vld [vmem:[%s229 + $0x60] sm:$0xff]
      %v257 = vld [vmem:[%s229 + $0x68] sm:$0xff]
      %v258 = vld [vmem:[%s229 + $0x70] sm:$0xff]
      %v259 = vld [vmem:[%s229 + $0x78] sm:$0xff]
      %v260 = vld [vmem:[%s229 + $0x80] sm:$0xff]
      %v261 = vld [vmem:[%s229 + $0x88] sm:$0xff]
      %v262 = vld [vmem:[%s229 + $0x90] sm:$0xff]
      %v263 = vld [vmem:[%s229 + $0x98] sm:$0xff]
      %v264 = vld [vmem:[%s229 + $0xa0] sm:$0xff]
      %v265 = vld [vmem:[%s229 + $0xa8] sm:$0xff]
      %v266 = vld [vmem:[%s229 + $0xb0] sm:$0xff]
      %v267 = vld [vmem:[%s229 + $0xb8] sm:$0xff]
      %v268 = vld [vmem:[%s229 + $0xc0] sm:$0xff]
      %v269 = vld [vmem:[%s229 + $0xc8] sm:$0xff]
      %v270 = vld [vmem:[%s229 + $0xd0] sm:$0xff]
      %v271 = vld [vmem:[%s229 + $0xd8] sm:$0xff]
      %v272 = vld [vmem:[%s229 + $0xe0] sm:$0xff]
      %v273 = vld [vmem:[%s229 + $0xe8] sm:$0xff]
      %v274 = vld [vmem:[%s229 + $0xf0] sm:$0xff]
      %v275 = vld [vmem:[%s229 + $0xf8] sm:$0xff]
      %v276 = vmul.f32 %v244, %v244
      %v277 = vmul.f32 %v245, %v245
      %v278 = vmul.f32 %v246, %v246
      %v279 = vmul.f32 %v247, %v247
      %v280 = vmul.f32 %v248, %v248
      %v281 = vmul.f32 %v249, %v249
      %v282 = vmul.f32 %v250, %v250
      %v283 = vmul.f32 %v251, %v251
      %v284 = vmul.f32 %v252, %v252
      %v285 = vmul.f32 %v253, %v253
      %v286 = vmul.f32 %v254, %v254
      %v287 = vmul.f32 %v255, %v255
      %v288 = vmul.f32 %v256, %v256
      %v289 = vmul.f32 %v257, %v257
      %v290 = vmul.f32 %v258, %v258
      %v291 = vmul.f32 %v259, %v259
      %v292 = vmul.f32 %v260, %v260
      %v293 = vmul.f32 %v261, %v261
      %v294 = vmul.f32 %v262, %v262
      %v295 = vmul.f32 %v263, %v263
      %v296 = vmul.f32 %v264, %v264
      %v297 = vmul.f32 %v265, %v265
      %v298 = vmul.f32 %v266, %v266
      %v299 = vmul.f32 %v267, %v267
      %v300 = vmul.f32 %v268, %v268
      %v301 = vmul.f32 %v269, %v269
      %v302 = vmul.f32 %v270, %v270
      %v303 = vmul.f32 %v271, %v271
      %v304 = vmul.f32 %v272, %v272
      %v305 = vmul.f32 %v273, %v273
      %v306 = vmul.f32 %v274, %v274
      %v307 = vmul.f32 %v275, %v275
      %vm308 = vcmask 392192
      %v309 = vsel %vm308, %v276, 0.0
      %310 = vadd.xlane.f32.xlu0 %v309
      %v311 = vpop.xlane.xlu0 %310
      %v312 = vsel %vm308, %v277, 0.0
      %313 = vadd.xlane.f32.xlu0 %v312
      %v314 = vpop.xlane.xlu0 %313
      %v315 = vsel %vm308, %v278, 0.0
      %316 = vadd.xlane.f32.xlu0 %v315
      %v317 = vpop.xlane.xlu0 %316
      %v318 = vsel %vm308, %v279, 0.0
      %319 = vadd.xlane.f32.xlu0 %v318
      %v320 = vpop.xlane.xlu0 %319
      %v321 = vsel %vm308, %v280, 0.0
      %322 = vadd.xlane.f32.xlu0 %v321
      %v323 = vpop.xlane.xlu0 %322
      %v324 = vsel %vm308, %v281, 0.0
      %325 = vadd.xlane.f32.xlu0 %v324
      %v326 = vpop.xlane.xlu0 %325
      %v327 = vsel %vm308, %v282, 0.0
      %328 = vadd.xlane.f32.xlu0 %v327
      %v329 = vpop.xlane.xlu0 %328
      %v330 = vsel %vm308, %v283, 0.0
      %331 = vadd.xlane.f32.xlu0 %v330
      %v332 = vpop.xlane.xlu0 %331
      %v333 = vsel %vm308, %v284, 0.0
      %334 = vadd.xlane.f32.xlu0 %v333
      %v335 = vpop.xlane.xlu0 %334
      %v336 = vsel %vm308, %v285, 0.0
      %337 = vadd.xlane.f32.xlu0 %v336
      %v338 = vpop.xlane.xlu0 %337
      %v339 = vsel %vm308, %v286, 0.0
      %340 = vadd.xlane.f32.xlu0 %v339
      %v341 = vpop.xlane.xlu0 %340
      %v342 = vsel %vm308, %v287, 0.0
      %343 = vadd.xlane.f32.xlu0 %v342
      %v344 = vpop.xlane.xlu0 %343
      %v345 = vsel %vm308, %v288, 0.0
      %346 = vadd.xlane.f32.xlu0 %v345
      %v347 = vpop.xlane.xlu0 %346
      %v348 = vsel %vm308, %v289, 0.0
      %349 = vadd.xlane.f32.xlu0 %v348
      %v350 = vpop.xlane.xlu0 %349
      %v351 = vsel %vm308, %v290, 0.0
      %352 = vadd.xlane.f32.xlu0 %v351
      %v353 = vpop.xlane.xlu0 %352
      %v354 = vsel %vm308, %v291, 0.0
      %355 = vadd.xlane.f32.xlu0 %v354
      %v356 = vpop.xlane.xlu0 %355
      %v357 = vsel %vm308, %v292, 0.0
      %358 = vadd.xlane.f32.xlu0 %v357
      %v359 = vpop.xlane.xlu0 %358
      %v360 = vsel %vm308, %v293, 0.0
      %361 = vadd.xlane.f32.xlu0 %v360
      %v362 = vpop.xlane.xlu0 %361
      %v363 = vsel %vm308, %v294, 0.0
      %364 = vadd.xlane.f32.xlu0 %v363
      %v365 = vpop.xlane.xlu0 %364
      %v366 = vsel %vm308, %v295, 0.0
      %367 = vadd.xlane.f32.xlu0 %v366
      %v368 = vpop.xlane.xlu0 %367
      %v369 = vsel %vm308, %v296, 0.0
      %370 = vadd.xlane.f32.xlu0 %v369
      %v371 = vpop.xlane.xlu0 %370
      %v372 = vsel %vm308, %v297, 0.0
      %373 = vadd.xlane.f32.xlu0 %v372
      %v374 = vpop.xlane.xlu0 %373
      %v375 = vsel %vm308, %v298, 0.0
      %376 = vadd.xlane.f32.xlu0 %v375
      %v377 = vpop.xlane.xlu0 %376
      %v378 = vsel %vm308, %v299, 0.0
      %379 = vadd.xlane.f32.xlu0 %v378
      %v380 = vpop.xlane.xlu0 %379
      %v381 = vsel %vm308, %v300, 0.0
      %382 = vadd.xlane.f32.xlu0 %v381
      %v383 = vpop.xlane.xlu0 %382
      %v384 = vsel %vm308, %v301, 0.0
      %385 = vadd.xlane.f32.xlu0 %v384
      %v386 = vpop.xlane.xlu0 %385
      %v387 = vsel %vm308, %v302, 0.0
      %388 = vadd.xlane.f32.xlu0 %v387
      %v389 = vpop.xlane.xlu0 %388
      %v390 = vsel %vm308, %v303, 0.0
      %391 = vadd.xlane.f32.xlu0 %v390
      %v392 = vpop.xlane.xlu0 %391
      %v393 = vsel %vm308, %v304, 0.0
      %394 = vadd.xlane.f32.xlu0 %v393
      %v395 = vpop.xlane.xlu0 %394
      %v396 = vsel %vm308, %v305, 0.0
      %397 = vadd.xlane.f32.xlu0 %v396
      %v398 = vpop.xlane.xlu0 %397
      %v399 = vsel %vm308, %v306, 0.0
      %400 = vadd.xlane.f32.xlu0 %v399
      %v401 = vpop.xlane.xlu0 %400
      %v402 = vsel %vm308, %v307, 0.0
      %403 = vadd.xlane.f32.xlu0 %v402
      %v404 = vpop.xlane.xlu0 %403
      %v405 = vrcp.pop 48.0
      %v406 = vmul.f32 %v311, %v405
      %v407 = vmul.f32 %v314, %v405
      %v408 = vmul.f32 %v317, %v405
      %v409 = vmul.f32 %v320, %v405
      %v410 = vmul.f32 %v323, %v405
      %v411 = vmul.f32 %v326, %v405
      %v412 = vmul.f32 %v329, %v405
      %v413 = vmul.f32 %v332, %v405
      %v414 = vmul.f32 %v335, %v405
      %v415 = vmul.f32 %v338, %v405
      %v416 = vmul.f32 %v341, %v405
      %v417 = vmul.f32 %v344, %v405
      %v418 = vmul.f32 %v347, %v405
      %v419 = vmul.f32 %v350, %v405
      %v420 = vmul.f32 %v353, %v405
      %v421 = vmul.f32 %v356, %v405
      %v422 = vmul.f32 %v359, %v405
      %v423 = vmul.f32 %v362, %v405
      %v424 = vmul.f32 %v365, %v405
      %v425 = vmul.f32 %v368, %v405
      %v426 = vmul.f32 %v371, %v405
      %v427 = vmul.f32 %v374, %v405
      %v428 = vmul.f32 %v377, %v405
      %v429 = vmul.f32 %v380, %v405
      %v430 = vmul.f32 %v383, %v405
      %v431 = vmul.f32 %v386, %v405
      %v432 = vmul.f32 %v389, %v405
      %v433 = vmul.f32 %v392, %v405
      %v434 = vmul.f32 %v395, %v405
      %v435 = vmul.f32 %v398, %v405
      %v436 = vmul.f32 %v401, %v405
      %v437 = vmul.f32 %v404, %v405
      %v438 = vadd.f32 %v406, 1e-06
      %v439 = vadd.f32 %v407, 1e-06
      %v440 = vadd.f32 %v408, 1e-06
      %v441 = vadd.f32 %v409, 1e-06
      %v442 = vadd.f32 %v410, 1e-06
      %v443 = vadd.f32 %v411, 1e-06
      %v444 = vadd.f32 %v412, 1e-06
      %v445 = vadd.f32 %v413, 1e-06
      %v446 = vadd.f32 %v414, 1e-06
      %v447 = vadd.f32 %v415, 1e-06
      %v448 = vadd.f32 %v416, 1e-06
      %v449 = vadd.f32 %v417, 1e-06
      %v450 = vadd.f32 %v418, 1e-06
      %v451 = vadd.f32 %v419, 1e-06
      %v452 = vadd.f32 %v420, 1e-06
      %v453 = vadd.f32 %v421, 1e-06
      %v454 = vadd.f32 %v422, 1e-06
      %v455 = vadd.f32 %v423, 1e-06
      %v456 = vadd.f32 %v424, 1e-06
      %v457 = vadd.f32 %v425, 1e-06
      %v458 = vadd.f32 %v426, 1e-06
      %v459 = vadd.f32 %v427, 1e-06
      %v460 = vadd.f32 %v428, 1e-06
      %v461 = vadd.f32 %v429, 1e-06
      %v462 = vadd.f32 %v430, 1e-06
      %v463 = vadd.f32 %v431, 1e-06
      %v464 = vadd.f32 %v432, 1e-06
      %v465 = vadd.f32 %v433, 1e-06
      %v466 = vadd.f32 %v434, 1e-06
      %v467 = vadd.f32 %v435, 1e-06
      %v468 = vadd.f32 %v436, 1e-06
      %v469 = vadd.f32 %v437, 1e-06
      %v470 = vrsqrt.pop %v438
      %v471 = vrsqrt.pop %v439
      %v472 = vrsqrt.pop %v440
      %v473 = vrsqrt.pop %v441
      %v474 = vrsqrt.pop %v442
      %v475 = vrsqrt.pop %v443
      %v476 = vrsqrt.pop %v444
      %v477 = vrsqrt.pop %v445
      %v478 = vrsqrt.pop %v446
      %v479 = vrsqrt.pop %v447
      %v480 = vrsqrt.pop %v448
      %v481 = vrsqrt.pop %v449
      %v482 = vrsqrt.pop %v450
      %v483 = vrsqrt.pop %v451
      %v484 = vrsqrt.pop %v452
      %v485 = vrsqrt.pop %v453
      %v486 = vrsqrt.pop %v454
      %v487 = vrsqrt.pop %v455
      %v488 = vrsqrt.pop %v456
      %v489 = vrsqrt.pop %v457
      %v490 = vrsqrt.pop %v458
      %v491 = vrsqrt.pop %v459
      %v492 = vrsqrt.pop %v460
      %v493 = vrsqrt.pop %v461
      %v494 = vrsqrt.pop %v462
      %v495 = vrsqrt.pop %v463
      %v496 = vrsqrt.pop %v464
      %v497 = vrsqrt.pop %v465
      %v498 = vrsqrt.pop %v466
      %v499 = vrsqrt.pop %v467
      %v500 = vrsqrt.pop %v468
      %v501 = vrsqrt.pop %v469
      %v502 = vmul.f32 %v244, %v470
      %v503 = vmul.f32 %v245, %v471
      %v504 = vmul.f32 %v246, %v472
      %v505 = vmul.f32 %v247, %v473
      %v506 = vmul.f32 %v248, %v474
      %v507 = vmul.f32 %v249, %v475
      %v508 = vmul.f32 %v250, %v476
      %v509 = vmul.f32 %v251, %v477
      %v510 = vmul.f32 %v252, %v478
      %v511 = vmul.f32 %v253, %v479
      %v512 = vmul.f32 %v254, %v480
      %v513 = vmul.f32 %v255, %v481
      %v514 = vmul.f32 %v256, %v482
      %v515 = vmul.f32 %v257, %v483
      %v516 = vmul.f32 %v258, %v484
      %v517 = vmul.f32 %v259, %v485
      %v518 = vmul.f32 %v260, %v486
      %v519 = vmul.f32 %v261, %v487
      %v520 = vmul.f32 %v262, %v488
      %v521 = vmul.f32 %v263, %v489
      %v522 = vmul.f32 %v264, %v490
      %v523 = vmul.f32 %v265, %v491
      %v524 = vmul.f32 %v266, %v492
      %v525 = vmul.f32 %v267, %v493
      %v526 = vmul.f32 %v268, %v494
      %v527 = vmul.f32 %v269, %v495
      %v528 = vmul.f32 %v270, %v496
      %v529 = vmul.f32 %v271, %v497
      %v530 = vmul.f32 %v272, %v498
      %v531 = vmul.f32 %v273, %v499
      %v532 = vmul.f32 %v274, %v500
      %v533 = vmul.f32 %v275, %v501
      %v534 = vld [vmem:[%s1] sm:$0x1]
      %v536 = vlaneseq
      %v537 = vshrl.u32 %v536, 7
      %v538 = vsub.s32 0, %v537
      %v539 = vrot.slane %v534, %v538
      %v541 = vmul.f32 %v502, %v539
      %v542 = vmul.f32 %v503, %v539
      %v543 = vmul.f32 %v504, %v539
      %v544 = vmul.f32 %v505, %v539
      %v545 = vmul.f32 %v506, %v539
      %v546 = vmul.f32 %v507, %v539
      %v547 = vmul.f32 %v508, %v539
      %v548 = vmul.f32 %v509, %v539
      %v549 = vmul.f32 %v510, %v539
      %v550 = vmul.f32 %v511, %v539
      %v551 = vmul.f32 %v512, %v539
      %v552 = vmul.f32 %v513, %v539
      %v553 = vmul.f32 %v514, %v539
      %v554 = vmul.f32 %v515, %v539
      %v555 = vmul.f32 %v516, %v539
      %v556 = vmul.f32 %v517, %v539
      %v557 = vmul.f32 %v518, %v539
      %v558 = vmul.f32 %v519, %v539
      %v559 = vmul.f32 %v520, %v539
      %v560 = vmul.f32 %v521, %v539
      %v561 = vmul.f32 %v522, %v539
      %v562 = vmul.f32 %v523, %v539
      %v563 = vmul.f32 %v524, %v539
      %v564 = vmul.f32 %v525, %v539
      %v565 = vmul.f32 %v526, %v539
      %v566 = vmul.f32 %v527, %v539
      %v567 = vmul.f32 %v528, %v539
      %v568 = vmul.f32 %v529, %v539
      %v569 = vmul.f32 %v530, %v539
      %v570 = vmul.f32 %v531, %v539
      %v571 = vmul.f32 %v532, %v539
      %v572 = vmul.f32 %v533, %v539
      %v573 = vld [vmem:[%s2] sm:$0xff]
      %v574 = vld [vmem:[%s2 + $0x8] sm:$0xff]
      %v575 = vld [vmem:[%s2 + $0x10] sm:$0xff]
      %v576 = vld [vmem:[%s2 + $0x18] sm:$0xff]
      %v577 = vld [vmem:[%s2 + $0x20] sm:$0xff]
      %v578 = vld [vmem:[%s2 + $0x28] sm:$0xff]
      %v579 = vld [vmem:[%s2 + $0x30] sm:$0xff]
      %v580 = vld [vmem:[%s2 + $0x38] sm:$0xff]
      %v581 = vld [vmem:[%s2 + $0x40] sm:$0xff]
      %v582 = vld [vmem:[%s2 + $0x48] sm:$0xff]
      %v583 = vld [vmem:[%s2 + $0x50] sm:$0xff]
      %v584 = vld [vmem:[%s2 + $0x58] sm:$0xff]
      %v585 = vld [vmem:[%s3] sm:$0x3]
      %v587 = vlaneseq
      %v588 = vshrl.u32 %v587, 7
      %v589 = vsub.s32 0, %v588
      %v590 = vrot.slane %v585, %v589
      %v591 = vlaneseq
      %v592 = vshrl.u32 %v591, 7
      %v593 = vsub.s32 1, %v592
      %v594 = vrot.slane %v585, %v593
      %v598 = vsel %vm308, %v541, 0
      %v601 = vsel %vm308, %v542, 0
      %v604 = vsel %vm308, %v543, 0
      %v607 = vsel %vm308, %v544, 0
      %v610 = vsel %vm308, %v545, 0
      %v613 = vsel %vm308, %v546, 0
      %v616 = vsel %vm308, %v547, 0
      %v619 = vsel %vm308, %v548, 0
      %v622 = vsel %vm308, %v549, 0
      %v625 = vsel %vm308, %v550, 0
      %v628 = vsel %vm308, %v551, 0
      %v631 = vsel %vm308, %v552, 0
      %v634 = vsel %vm308, %v553, 0
      %v637 = vsel %vm308, %v554, 0
      %v640 = vsel %vm308, %v555, 0
      %v643 = vsel %vm308, %v556, 0
      %v646 = vsel %vm308, %v557, 0
      %v649 = vsel %vm308, %v558, 0
      %v652 = vsel %vm308, %v559, 0
      %v655 = vsel %vm308, %v560, 0
      %v658 = vsel %vm308, %v561, 0
      %v661 = vsel %vm308, %v562, 0
      %v664 = vsel %vm308, %v563, 0
      %v667 = vsel %vm308, %v564, 0
      %v670 = vsel %vm308, %v565, 0
      %v673 = vsel %vm308, %v566, 0
      %v676 = vsel %vm308, %v567, 0
      %v679 = vsel %vm308, %v568, 0
      %v682 = vsel %vm308, %v569, 0
      %v685 = vsel %vm308, %v570, 0
      %v688 = vsel %vm308, %v571, 0
      %v691 = vsel %vm308, %v572, 0
      %693 = vmatprep.subr.mxu0 %v574
      %694 = vmatpush1.msra.mxu0 %v573
      %695 = vmatprep.subr.mxu0 %v576
      %696 = vmatpush1.msra.mxu0 %v575
      %697 = vmatprep.subr.mxu0 %v578
      %698 = vmatpush1.msra.mxu0 %v577
      %699 = vmatprep.subr.mxu0 %v580
      %700 = vmatpush1.msra.mxu0 %v579
      %701 = vmatprep.subr.mxu0 %v582
      %702 = vmatpush1.msra.mxu0 %v581
      %703 = vmatprep.subr.mxu0 %v584
      %704 = vmatpush1.msra.mxu0 %v583
      %705 = vmatprep.subr.mxu0 0.0
      %706 = vmatpush1.msra.mxu0 0.0
      %707 = vmatprep.subr.mxu0 0.0
      %708 = vmatpush1.msra.mxu0 0.0
      %709 = vmatprep.subr.mxu0 0.0
      %710 = vmatpush1.msra.mxu0 0.0
      %711 = vmatprep.subr.mxu0 0.0
      %712 = vmatpush1.msra.mxu0 0.0
      %713 = vmatprep.subr.mxu0 0.0
      %714 = vmatpush1.msra.mxu0 0.0
      %715 = vmatprep.subr.mxu0 0.0
      %716 = vmatpush1.msra.mxu0 0.0
      %717 = vmatprep.subr.mxu0 0.0
      %718 = vmatpush1.msra.mxu0 0.0
      %719 = vmatprep.subr.mxu0 0.0
      %720 = vmatpush1.msra.mxu0 0.0
      %721 = vmatprep.subr.mxu0 0.0
      %722 = vmatpush1.msra.mxu0 0.0
      %723 = vmatprep.subr.mxu0 0.0
      %724 = vmatpush1.msra.mxu0 0.0
      %725 = vmatprep.subr.mxu0 0.0
      %726 = vmatpush1.msra.mxu0 0.0
      %727 = vmatprep.subr.mxu0 0.0
      %728 = vmatpush1.msra.mxu0 0.0
      %729 = vmatprep.subr.mxu0 0.0
      %730 = vmatpush1.msra.mxu0 0.0
      %731 = vmatprep.subr.mxu0 0.0
      %732 = vmatpush1.msra.mxu0 0.0
      %733 = vmatprep.subr.mxu0 0.0
      %734 = vmatpush1.msra.mxu0 0.0
      %735 = vmatprep.subr.mxu0 0.0
      %736 = vmatpush1.msra.mxu0 0.0
      %737 = vmatprep.subr.mxu0 0.0
      %738 = vmatpush1.msra.mxu0 0.0
      %739 = vmatprep.subr.mxu0 0.0
      %740 = vmatpush1.msra.mxu0 0.0
      %741 = vmatprep.subr.mxu0 0.0
      %742 = vmatpush1.msra.mxu0 0.0
      %743 = vmatprep.subr.mxu0 0.0
      %744 = vmatpush1.msra.mxu0 0.0
      %745 = vmatprep.subr.mxu0 0.0
      %746 = vmatpush1.msra.mxu0 0.0
      %747 = vmatprep.subr.mxu0 0.0
      %748 = vmatpush1.msra.mxu0 0.0
      %749 = vmatprep.subr.mxu0 0.0
      %750 = vmatpush1.msra.mxu0 0.0
      %751 = vmatprep.subr.mxu0 0.0
      %752 = vmatpush1.msra.mxu0 0.0
      %753 = vmatprep.subr.mxu0 0.0
      %754 = vmatpush1.msra.mxu0 0.0
      %755 = vmatprep.subr.mxu0 0.0
      %756 = vmatpush1.msra.mxu0 0.0
      %757 = vmatprep.mubr.f32.mxu0 0.0
      %758 = vmatmul.mubr.f32.gmra.mrb[0].mxu0 %v598
      %v759 = vpop.f32.mrb[0].mxu0
      %v760 = vadd.f32 %v590, %v759
      %v761 = vpop.f32.mrb[0].mxu0
      %v762 = vadd.f32 %v594, %v761
      %763 = vmatprep.mubr.f32.mxu0 0.0
      %764 = vmatmul.mubr.f32.gmra.mrb[0].mxu0 %v601
      %v765 = vpop.f32.mrb[0].mxu0
      %v766 = vadd.f32 %v590, %v765
      %v767 = vpop.f32.mrb[0].mxu0
      %v768 = vadd.f32 %v594, %v767
      %769 = vmatprep.mubr.f32.mxu0 0.0
      %770 = vmatmul.mubr.f32.gmra.mrb[0].mxu0 %v604
      %v771 = vpop.f32.mrb[0].mxu0
      %v772 = vadd.f32 %v590, %v771
      %v773 = vpop.f32.mrb[0].mxu0
      %v774 = vadd.f32 %v594, %v773
      %775 = vmatprep.mubr.f32.mxu0 0.0
      %776 = vmatmul.mubr.f32.gmra.mrb[0].mxu0 %v607
      %v777 = vpop.f32.mrb[0].mxu0
      %v778 = vadd.f32 %v590, %v777
      %v779 = vpop.f32.mrb[0].mxu0
      %v780 = vadd.f32 %v594, %v779
      %781 = vmatprep.mubr.f32.mxu0 0.0
      %782 = vmatmul.mubr.f32.gmra.mrb[0].mxu0 %v610
      %v783 = vpop.f32.mrb[0].mxu0
      %v784 = vadd.f32 %v590, %v783
      %v785 = vpop.f32.mrb[0].mxu0
      %v786 = vadd.f32 %v594, %v785
      %787 = vmatprep.mubr.f32.mxu0 0.0
      %788 = vmatmul.mubr.f32.gmra.mrb[0].mxu0 %v613
      %v789 = vpop.f32.mrb[0].mxu0
      %v790 = vadd.f32 %v590, %v789
      %v791 = vpop.f32.mrb[0].mxu0
      %v792 = vadd.f32 %v594, %v791
      %793 = vmatprep.mubr.f32.mxu0 0.0
      %794 = vmatmul.mubr.f32.gmra.mrb[0].mxu0 %v616
      %v795 = vpop.f32.mrb[0].mxu0
      %v796 = vadd.f32 %v590, %v795
      %v797 = vpop.f32.mrb[0].mxu0
      %v798 = vadd.f32 %v594, %v797
      %799 = vmatprep.mubr.f32.mxu0 0.0
      %800 = vmatmul.mubr.f32.gmra.mrb[0].mxu0 %v619
      %v801 = vpop.f32.mrb[0].mxu0
      %v802 = vadd.f32 %v590, %v801
      %v803 = vpop.f32.mrb[0].mxu0
      %v804 = vadd.f32 %v594, %v803
      %805 = vmatprep.mubr.f32.mxu0 0.0
      %806 = vmatmul.mubr.f32.gmra.mrb[0].mxu0 %v622
      %v807 = vpop.f32.mrb[0].mxu0
      %v808 = vadd.f32 %v590, %v807
      %v809 = vpop.f32.mrb[0].mxu0
      %v810 = vadd.f32 %v594, %v809
      %811 = vmatprep.mubr.f32.mxu0 0.0
      %812 = vmatmul.mubr.f32.gmra.mrb[0].mxu0 %v625
      %v813 = vpop.f32.mrb[0].mxu0
      %v814 = vadd.f32 %v590, %v813
      %v815 = vpop.f32.mrb[0].mxu0
      %v816 = vadd.f32 %v594, %v815
      %817 = vmatprep.mubr.f32.mxu0 0.0
      %818 = vmatmul.mubr.f32.gmra.mrb[0].mxu0 %v628
      %v819 = vpop.f32.mrb[0].mxu0
      %v820 = vadd.f32 %v590, %v819
      %v821 = vpop.f32.mrb[0].mxu0
      %v822 = vadd.f32 %v594, %v821
      %823 = vmatprep.mubr.f32.mxu0 0.0
      %824 = vmatmul.mubr.f32.gmra.mrb[0].mxu0 %v631
      %v825 = vpop.f32.mrb[0].mxu0
      %v826 = vadd.f32 %v590, %v825
      %v827 = vpop.f32.mrb[0].mxu0
      %v828 = vadd.f32 %v594, %v827
      %829 = vmatprep.mubr.f32.mxu0 0.0
      %830 = vmatmul.mubr.f32.gmra.mrb[0].mxu0 %v634
      %v831 = vpop.f32.mrb[0].mxu0
      %v832 = vadd.f32 %v590, %v831
      %v833 = vpop.f32.mrb[0].mxu0
      %v834 = vadd.f32 %v594, %v833
      %835 = vmatprep.mubr.f32.mxu0 0.0
      %836 = vmatmul.mubr.f32.gmra.mrb[0].mxu0 %v637
      %v837 = vpop.f32.mrb[0].mxu0
      %v838 = vadd.f32 %v590, %v837
      %v839 = vpop.f32.mrb[0].mxu0
      %v840 = vadd.f32 %v594, %v839
      %841 = vmatprep.mubr.f32.mxu0 0.0
      %842 = vmatmul.mubr.f32.gmra.mrb[0].mxu0 %v640
      %v843 = vpop.f32.mrb[0].mxu0
      %v844 = vadd.f32 %v590, %v843
      %v845 = vpop.f32.mrb[0].mxu0
      %v846 = vadd.f32 %v594, %v845
      %847 = vmatprep.mubr.f32.mxu0 0.0
      %848 = vmatmul.mubr.f32.gmra.mrb[0].mxu0 %v643
      %v849 = vpop.f32.mrb[0].mxu0
      %v850 = vadd.f32 %v590, %v849
      %v851 = vpop.f32.mrb[0].mxu0
      %v852 = vadd.f32 %v594, %v851
      %853 = vmatprep.mubr.f32.mxu0 0.0
      %854 = vmatmul.mubr.f32.gmra.mrb[0].mxu0 %v646
      %v855 = vpop.f32.mrb[0].mxu0
      %v856 = vadd.f32 %v590, %v855
      %v857 = vpop.f32.mrb[0].mxu0
      %v858 = vadd.f32 %v594, %v857
      %859 = vmatprep.mubr.f32.mxu0 0.0
      %860 = vmatmul.mubr.f32.gmra.mrb[0].mxu0 %v649
      %v861 = vpop.f32.mrb[0].mxu0
      %v862 = vadd.f32 %v590, %v861
      %v863 = vpop.f32.mrb[0].mxu0
      %v864 = vadd.f32 %v594, %v863
      %865 = vmatprep.mubr.f32.mxu0 0.0
      %866 = vmatmul.mubr.f32.gmra.mrb[0].mxu0 %v652
      %v867 = vpop.f32.mrb[0].mxu0
      %v868 = vadd.f32 %v590, %v867
      %v869 = vpop.f32.mrb[0].mxu0
      %v870 = vadd.f32 %v594, %v869
      %871 = vmatprep.mubr.f32.mxu0 0.0
      %872 = vmatmul.mubr.f32.gmra.mrb[0].mxu0 %v655
      %v873 = vpop.f32.mrb[0].mxu0
      %v874 = vadd.f32 %v590, %v873
      %v875 = vpop.f32.mrb[0].mxu0
      %v876 = vadd.f32 %v594, %v875
      %877 = vmatprep.mubr.f32.mxu0 0.0
      %878 = vmatmul.mubr.f32.gmra.mrb[0].mxu0 %v658
      %v879 = vpop.f32.mrb[0].mxu0
      %v880 = vadd.f32 %v590, %v879
      %v881 = vpop.f32.mrb[0].mxu0
      %v882 = vadd.f32 %v594, %v881
      %883 = vmatprep.mubr.f32.mxu0 0.0
      %884 = vmatmul.mubr.f32.gmra.mrb[0].mxu0 %v661
      %v885 = vpop.f32.mrb[0].mxu0
      %v886 = vadd.f32 %v590, %v885
      %v887 = vpop.f32.mrb[0].mxu0
      %v888 = vadd.f32 %v594, %v887
      %889 = vmatprep.mubr.f32.mxu0 0.0
      %890 = vmatmul.mubr.f32.gmra.mrb[0].mxu0 %v664
      %v891 = vpop.f32.mrb[0].mxu0
      %v892 = vadd.f32 %v590, %v891
      %v893 = vpop.f32.mrb[0].mxu0
      %v894 = vadd.f32 %v594, %v893
      %895 = vmatprep.mubr.f32.mxu0 0.0
      %896 = vmatmul.mubr.f32.gmra.mrb[0].mxu0 %v667
      %v897 = vpop.f32.mrb[0].mxu0
      %v898 = vadd.f32 %v590, %v897
      %v899 = vpop.f32.mrb[0].mxu0
      %v900 = vadd.f32 %v594, %v899
      %901 = vmatprep.mubr.f32.mxu0 0.0
      %902 = vmatmul.mubr.f32.gmra.mrb[0].mxu0 %v670
      %v903 = vpop.f32.mrb[0].mxu0
      %v904 = vadd.f32 %v590, %v903
      %v905 = vpop.f32.mrb[0].mxu0
      %v906 = vadd.f32 %v594, %v905
      %907 = vmatprep.mubr.f32.mxu0 0.0
      %908 = vmatmul.mubr.f32.gmra.mrb[0].mxu0 %v673
      %v909 = vpop.f32.mrb[0].mxu0
      %v910 = vadd.f32 %v590, %v909
      %v911 = vpop.f32.mrb[0].mxu0
      %v912 = vadd.f32 %v594, %v911
      %913 = vmatprep.mubr.f32.mxu0 0.0
      %914 = vmatmul.mubr.f32.gmra.mrb[0].mxu0 %v676
      %v915 = vpop.f32.mrb[0].mxu0
      %v916 = vadd.f32 %v590, %v915
      %v917 = vpop.f32.mrb[0].mxu0
      %v918 = vadd.f32 %v594, %v917
      %919 = vmatprep.mubr.f32.mxu0 0.0
      %920 = vmatmul.mubr.f32.gmra.mrb[0].mxu0 %v679
      %v921 = vpop.f32.mrb[0].mxu0
      %v922 = vadd.f32 %v590, %v921
      %v923 = vpop.f32.mrb[0].mxu0
      %v924 = vadd.f32 %v594, %v923
      %925 = vmatprep.mubr.f32.mxu0 0.0
      %926 = vmatmul.mubr.f32.gmra.mrb[0].mxu0 %v682
      %v927 = vpop.f32.mrb[0].mxu0
      %v928 = vadd.f32 %v590, %v927
      %v929 = vpop.f32.mrb[0].mxu0
      %v930 = vadd.f32 %v594, %v929
      %931 = vmatprep.mubr.f32.mxu0 0.0
      %932 = vmatmul.mubr.f32.gmra.mrb[0].mxu0 %v685
      %v933 = vpop.f32.mrb[0].mxu0
      %v934 = vadd.f32 %v590, %v933
      %v935 = vpop.f32.mrb[0].mxu0
      %v936 = vadd.f32 %v594, %v935
      %937 = vmatprep.mubr.f32.mxu0 0.0
      %938 = vmatmul.mubr.f32.gmra.mrb[0].mxu0 %v688
      %v939 = vpop.f32.mrb[0].mxu0
      %v940 = vadd.f32 %v590, %v939
      %v941 = vpop.f32.mrb[0].mxu0
      %v942 = vadd.f32 %v594, %v941
      %943 = vmatprep.mubr.f32.mxu0 0.0
      %944 = vmatmul.mubr.f32.gmra.mrb[0].mxu0 %v691
      %v945 = vpop.f32.mrb[0].mxu0
      %v946 = vadd.f32 %v590, %v945
      %v947 = vpop.f32.mrb[0].mxu0
      %v948 = vadd.f32 %v594, %v947
      %949 = vdwg.mxu0
      %950 = vst [vmem:[%s236] sm:$0xff] %v760
      %vm951 = vcmask 654336
      %952 = vst.msk [vmem:[%s236 + $0x8] sm:$0xff] %vm951, %v762
      %953 = vst [vmem:[%s236 + $0x10] sm:$0xff] %v766
      %954 = vst.msk [vmem:[%s236 + $0x18] sm:$0xff] %vm951, %v768
      %955 = vst [vmem:[%s236 + $0x20] sm:$0xff] %v772
      %956 = vst.msk [vmem:[%s236 + $0x28] sm:$0xff] %vm951, %v774
      %957 = vst [vmem:[%s236 + $0x30] sm:$0xff] %v778
      %958 = vst.msk [vmem:[%s236 + $0x38] sm:$0xff] %vm951, %v780
      %959 = vst [vmem:[%s236 + $0x40] sm:$0xff] %v784
      %960 = vst.msk [vmem:[%s236 + $0x48] sm:$0xff] %vm951, %v786
      %961 = vst [vmem:[%s236 + $0x50] sm:$0xff] %v790
      %962 = vst.msk [vmem:[%s236 + $0x58] sm:$0xff] %vm951, %v792
      %963 = vst [vmem:[%s236 + $0x60] sm:$0xff] %v796
      %964 = vst.msk [vmem:[%s236 + $0x68] sm:$0xff] %vm951, %v798
      %965 = vst [vmem:[%s236 + $0x70] sm:$0xff] %v802
      %966 = vst.msk [vmem:[%s236 + $0x78] sm:$0xff] %vm951, %v804
      %967 = vst [vmem:[%s236 + $0x80] sm:$0xff] %v808
      %968 = vst.msk [vmem:[%s236 + $0x88] sm:$0xff] %vm951, %v810
      %969 = vst [vmem:[%s236 + $0x90] sm:$0xff] %v814
      %970 = vst.msk [vmem:[%s236 + $0x98] sm:$0xff] %vm951, %v816
      %971 = vst [vmem:[%s236 + $0xa0] sm:$0xff] %v820
      %972 = vst.msk [vmem:[%s236 + $0xa8] sm:$0xff] %vm951, %v822
      %973 = vst [vmem:[%s236 + $0xb0] sm:$0xff] %v826
      %974 = vst.msk [vmem:[%s236 + $0xb8] sm:$0xff] %vm951, %v828
      %975 = vst [vmem:[%s236 + $0xc0] sm:$0xff] %v832
      %976 = vst.msk [vmem:[%s236 + $0xc8] sm:$0xff] %vm951, %v834
      %977 = vst [vmem:[%s236 + $0xd0] sm:$0xff] %v838
      %978 = vst.msk [vmem:[%s236 + $0xd8] sm:$0xff] %vm951, %v840
      %979 = vst [vmem:[%s236 + $0xe0] sm:$0xff] %v844
      %980 = vst.msk [vmem:[%s236 + $0xe8] sm:$0xff] %vm951, %v846
      %981 = vst [vmem:[%s236 + $0xf0] sm:$0xff] %v850
      %982 = vst.msk [vmem:[%s236 + $0xf8] sm:$0xff] %vm951, %v852
      %983 = vst [vmem:[%s236 + $0x100] sm:$0xff] %v856
      %984 = vst.msk [vmem:[%s236 + $0x108] sm:$0xff] %vm951, %v858
      %985 = vst [vmem:[%s236 + $0x110] sm:$0xff] %v862
      %986 = vst.msk [vmem:[%s236 + $0x118] sm:$0xff] %vm951, %v864
      %987 = vst [vmem:[%s236 + $0x120] sm:$0xff] %v868
      %988 = vst.msk [vmem:[%s236 + $0x128] sm:$0xff] %vm951, %v870
      %989 = vst [vmem:[%s236 + $0x130] sm:$0xff] %v874
      %990 = vst.msk [vmem:[%s236 + $0x138] sm:$0xff] %vm951, %v876
      %991 = vst [vmem:[%s236 + $0x140] sm:$0xff] %v880
      %992 = vst.msk [vmem:[%s236 + $0x148] sm:$0xff] %vm951, %v882
      %993 = vst [vmem:[%s236 + $0x150] sm:$0xff] %v886
      %994 = vst.msk [vmem:[%s236 + $0x158] sm:$0xff] %vm951, %v888
      %995 = vst [vmem:[%s236 + $0x160] sm:$0xff] %v892
      %996 = vst.msk [vmem:[%s236 + $0x168] sm:$0xff] %vm951, %v894
      %997 = vst [vmem:[%s236 + $0x170] sm:$0xff] %v898
      %998 = vst.msk [vmem:[%s236 + $0x178] sm:$0xff] %vm951, %v900
      %999 = vst [vmem:[%s236 + $0x180] sm:$0xff] %v904
      %1000 = vst.msk [vmem:[%s236 + $0x188] sm:$0xff] %vm951, %v906
      %1001 = vst [vmem:[%s236 + $0x190] sm:$0xff] %v910
      %1002 = vst.msk [vmem:[%s236 + $0x198] sm:$0xff] %vm951, %v912
      %1003 = vst [vmem:[%s236 + $0x1a0] sm:$0xff] %v916
      %1004 = vst.msk [vmem:[%s236 + $0x1a8] sm:$0xff] %vm951, %v918
      %1005 = vst [vmem:[%s236 + $0x1b0] sm:$0xff] %v922
      %1006 = vst.msk [vmem:[%s236 + $0x1b8] sm:$0xff] %vm951, %v924
      %1007 = vst [vmem:[%s236 + $0x1c0] sm:$0xff] %v928
      %1008 = vst.msk [vmem:[%s236 + $0x1c8] sm:$0xff] %vm951, %v930
      %1009 = vst [vmem:[%s236 + $0x1d0] sm:$0xff] %v934
      %1010 = vst.msk [vmem:[%s236 + $0x1d8] sm:$0xff] %vm951, %v936
      %1011 = vst [vmem:[%s236 + $0x1e0] sm:$0xff] %v940
      %1012 = vst.msk [vmem:[%s236 + $0x1e8] sm:$0xff] %vm951, %v942
      %1013 = vst [vmem:[%s236 + $0x1f0] sm:$0xff] %v946
      %1014 = vst.msk [vmem:[%s236 + $0x1f8] sm:$0xff] %vm951, %v948
      %1047 = vrot.lane.b32.xlu0 %v762, 48
      %v1048 = vpop.permute.xlu0 %1047
      %1049 = vrot.lane.b32.xlu0 %v768, 48
      %v1050 = vpop.permute.xlu0 %1049
      %1051 = vrot.lane.b32.xlu0 %v774, 48
      %v1052 = vpop.permute.xlu0 %1051
      %1053 = vrot.lane.b32.xlu0 %v780, 48
      %v1054 = vpop.permute.xlu0 %1053
      %1055 = vrot.lane.b32.xlu0 %v786, 48
      %v1056 = vpop.permute.xlu0 %1055
      %1057 = vrot.lane.b32.xlu0 %v792, 48
      %v1058 = vpop.permute.xlu0 %1057
      %1059 = vrot.lane.b32.xlu0 %v798, 48
      %v1060 = vpop.permute.xlu0 %1059
      %1061 = vrot.lane.b32.xlu0 %v804, 48
      %v1062 = vpop.permute.xlu0 %1061
      %1063 = vrot.lane.b32.xlu0 %v810, 48
      %v1064 = vpop.permute.xlu0 %1063
      %1065 = vrot.lane.b32.xlu0 %v816, 48
      %v1066 = vpop.permute.xlu0 %1065
      %1067 = vrot.lane.b32.xlu0 %v822, 48
      %v1068 = vpop.permute.xlu0 %1067
      %1069 = vrot.lane.b32.xlu0 %v828, 48
      %v1070 = vpop.permute.xlu0 %1069
      %1071 = vrot.lane.b32.xlu0 %v834, 48
      %v1072 = vpop.permute.xlu0 %1071
      %1073 = vrot.lane.b32.xlu0 %v840, 48
      %v1074 = vpop.permute.xlu0 %1073
      %1075 = vrot.lane.b32.xlu0 %v846, 48
      %v1076 = vpop.permute.xlu0 %1075
      %1077 = vrot.lane.b32.xlu0 %v852, 48
      %v1078 = vpop.permute.xlu0 %1077
      %1079 = vrot.lane.b32.xlu0 %v858, 48
      %v1080 = vpop.permute.xlu0 %1079
      %1081 = vrot.lane.b32.xlu0 %v864, 48
      %v1082 = vpop.permute.xlu0 %1081
      %1083 = vrot.lane.b32.xlu0 %v870, 48
      %v1084 = vpop.permute.xlu0 %1083
      %1085 = vrot.lane.b32.xlu0 %v876, 48
      %v1086 = vpop.permute.xlu0 %1085
      %1087 = vrot.lane.b32.xlu0 %v882, 48
      %v1088 = vpop.permute.xlu0 %1087
      %1089 = vrot.lane.b32.xlu0 %v888, 48
      %v1090 = vpop.permute.xlu0 %1089
      %1091 = vrot.lane.b32.xlu0 %v894, 48
      %v1092 = vpop.permute.xlu0 %1091
      %1093 = vrot.lane.b32.xlu0 %v900, 48
      %v1094 = vpop.permute.xlu0 %1093
      %1095 = vrot.lane.b32.xlu0 %v906, 48
      %v1096 = vpop.permute.xlu0 %1095
      %1097 = vrot.lane.b32.xlu0 %v912, 48
      %v1098 = vpop.permute.xlu0 %1097
      %1099 = vrot.lane.b32.xlu0 %v918, 48
      %v1100 = vpop.permute.xlu0 %1099
      %1101 = vrot.lane.b32.xlu0 %v924, 48
      %v1102 = vpop.permute.xlu0 %1101
      %1103 = vrot.lane.b32.xlu0 %v930, 48
      %v1104 = vpop.permute.xlu0 %1103
      %1105 = vrot.lane.b32.xlu0 %v936, 48
      %v1106 = vpop.permute.xlu0 %1105
      %1107 = vrot.lane.b32.xlu0 %v942, 48
      %v1108 = vpop.permute.xlu0 %1107
      %1109 = vrot.lane.b32.xlu0 %v948, 48
      %v1110 = vpop.permute.xlu0 %1109
      %1143 = vst.msk [vmem:[%s242] sm:$0xff] %vm308, %v1048
      %1144 = vst.msk [vmem:[%s242 + $0x8] sm:$0xff] %vm308, %v1050
      %1145 = vst.msk [vmem:[%s242 + $0x10] sm:$0xff] %vm308, %v1052
      %1146 = vst.msk [vmem:[%s242 + $0x18] sm:$0xff] %vm308, %v1054
      %1147 = vst.msk [vmem:[%s242 + $0x20] sm:$0xff] %vm308, %v1056
      %1148 = vst.msk [vmem:[%s242 + $0x28] sm:$0xff] %vm308, %v1058
      %1149 = vst.msk [vmem:[%s242 + $0x30] sm:$0xff] %vm308, %v1060
      %1150 = vst.msk [vmem:[%s242 + $0x38] sm:$0xff] %vm308, %v1062
      %1151 = vst.msk [vmem:[%s242 + $0x40] sm:$0xff] %vm308, %v1064
      %1152 = vst.msk [vmem:[%s242 + $0x48] sm:$0xff] %vm308, %v1066
      %1153 = vst.msk [vmem:[%s242 + $0x50] sm:$0xff] %vm308, %v1068
      %1154 = vst.msk [vmem:[%s242 + $0x58] sm:$0xff] %vm308, %v1070
      %1155 = vst.msk [vmem:[%s242 + $0x60] sm:$0xff] %vm308, %v1072
      %1156 = vst.msk [vmem:[%s242 + $0x68] sm:$0xff] %vm308, %v1074
      %1157 = vst.msk [vmem:[%s242 + $0x70] sm:$0xff] %vm308, %v1076
      %1158 = vst.msk [vmem:[%s242 + $0x78] sm:$0xff] %vm308, %v1078
      %1159 = vst.msk [vmem:[%s242 + $0x80] sm:$0xff] %vm308, %v1080
      %1160 = vst.msk [vmem:[%s242 + $0x88] sm:$0xff] %vm308, %v1082
      %1161 = vst.msk [vmem:[%s242 + $0x90] sm:$0xff] %vm308, %v1084
      %1162 = vst.msk [vmem:[%s242 + $0x98] sm:$0xff] %vm308, %v1086
      %1163 = vst.msk [vmem:[%s242 + $0xa0] sm:$0xff] %vm308, %v1088
      %1164 = vst.msk [vmem:[%s242 + $0xa8] sm:$0xff] %vm308, %v1090
      %1165 = vst.msk [vmem:[%s242 + $0xb0] sm:$0xff] %vm308, %v1092
      %1166 = vst.msk [vmem:[%s242 + $0xb8] sm:$0xff] %vm308, %v1094
      %1167 = vst.msk [vmem:[%s242 + $0xc0] sm:$0xff] %vm308, %v1096
      %1168 = vst.msk [vmem:[%s242 + $0xc8] sm:$0xff] %vm308, %v1098
      %1169 = vst.msk [vmem:[%s242 + $0xd0] sm:$0xff] %vm308, %v1100
      %1170 = vst.msk [vmem:[%s242 + $0xd8] sm:$0xff] %vm308, %v1102
      %1171 = vst.msk [vmem:[%s242 + $0xe0] sm:$0xff] %vm308, %v1104
      %1172 = vst.msk [vmem:[%s242 + $0xe8] sm:$0xff] %vm308, %v1106
      %1173 = vst.msk [vmem:[%s242 + $0xf0] sm:$0xff] %vm308, %v1108
      %1174 = vst.msk [vmem:[%s242 + $0xf8] sm:$0xff] %vm308, %v1110
      %s1175 = smul.u32 32, %s17
      %p1176 = scmp.lt.s32.totalorder %s1175, 63
      %s1177 = scalar_select %p1176, %s1175, 63
      %s1178 = smul.addr %s1177, 2
      %s1179 = smul.addr %s1178, 8
      %s1180 = scalar_lea.vmem %s4, %s1179
      %s1181 = smul.u32 32, %s17
      %p1182 = scmp.lt.s32.totalorder %s1181, 63
      %s1183 = scalar_select %p1182, %s1181, 63
      %s1184 = smul.addr %s1183, 8
      %s1185 = scalar_lea.vmem %s5, %s1184
      // Predicated region
      $region37: #{tpu_custom_call.1} parent=35 // pred_check
        %p1186 = pneg %p124
      $region38: #{tpu_custom_call.1} parent=35 // pred_check_branch
        %1188 = sbr.rel (%p1186) target = $region40
      $region39: #{tpu_custom_call.1} parent=35 // pred_region
        %s1189 = smul.u32 32, %s17
      $region40: #{tpu_custom_call.1} parent=35 // pred_fallthru
        _
      // Predicated region
      $region41: #{tpu_custom_call.1} parent=35 // pred_check
        %p1190 = pneg %p150
      $region42: #{tpu_custom_call.1} parent=35 // pred_check_branch
        %1192 = sbr.rel (%p1190) target = $region44
      $region43: #{tpu_custom_call.1} parent=35 // pred_region
        %s1193 = smul.u32 32, %s17
      $region44: #{tpu_custom_call.1} parent=35 // pred_fallthru
        _
    $region36: #{tpu_custom_call.1} parent=5 // pred_fallthru
      _
    %p1194 = scmp.le.s32.totalorder 2, %s12
    // Predicated region
    $region45: #{tpu_custom_call.1} parent=5 // pred_check
      %p1195 = pneg %p1194
    $region46: #{tpu_custom_call.1} parent=5 // pred_check_branch
      %1197 = sbr.rel (%p1195) target = $region48
    $region47: #{tpu_custom_call.1} parent=5 // pred_region
      %s1198 = ssub.s32 %s12, 2
      // Predicated region
      $region49: #{tpu_custom_call.1} parent=47 // pred_check
        %p1199 = pneg %p130
      $region50: #{tpu_custom_call.1} parent=47 // pred_check_branch
        %1201 = sbr.rel (%p1199) target = $region52
      $region51: #{tpu_custom_call.1} parent=47 // pred_region
        %s1202 = smul.u32 32, %s18
        %p1203 = scmp.lt.s32.totalorder %s1202, 63
        %s1204 = scalar_select %p1203, %s1202, 63
        %s1205 = smul.addr %s1204, 2
        %s1206 = smul.addr %s1205, 8
        %s1207 = scalar_lea.vmem %s4, %s1206
      $region52: #{tpu_custom_call.1} parent=47 // pred_fallthru
        _
      // Predicated region
      $region53: #{tpu_custom_call.1} parent=47 // pred_check
        %p1208 = pneg %p156
      $region54: #{tpu_custom_call.1} parent=47 // pred_check_branch
        %1210 = sbr.rel (%p1208) target = $region56
      $region55: #{tpu_custom_call.1} parent=47 // pred_region
        %s1211 = smul.u32 32, %s18
        %p1212 = scmp.lt.s32.totalorder %s1211, 63
        %s1213 = scalar_select %p1212, %s1211, 63
        %s1214 = smul.addr %s1213, 8
        %s1215 = scalar_lea.vmem %s5, %s1214
      $region56: #{tpu_custom_call.1} parent=47 // pred_fallthru
        _
    $region48: #{tpu_custom_call.1} parent=5 // pred_fallthru
      _
  $region6: #{tpu_custom_call.1} parent=0 // loop_footer
    %s16 = sadd.s32 1, %s12
  $region7: #{tpu_custom_call.1} parent=0 // loop_footer_branch
    %11 = sbr.rel target = $region3
  $region8: #{tpu_custom_call.1} parent=0 // loop_exit
    _

</llo_original>
